<compile_context>
chip_gen: v5e
topology: v5e:2x2
jax: 0.10.0
libtpu: 0.0.40
codegen_flags: <defaults>
</compile_context>

<pallas_src>
import functools
import math

import jax
import jax.numpy as jnp
from jax import lax
from jax.experimental import pallas as pl
from jax.experimental.pallas import tpu as pltpu


def _round_up(x, m):
    return ((x + m - 1) // m) * m


def actor_kernel(x_ref,
                 w1_ref, b1_ref,
                 w2_ref, b2_ref,
                 w3_ref, b3_ref,
                 wh_ref, bh_ref,
                 out_ref, *, half):
    """fc1->relu->fc2->relu->fc3->relu->[mean|log_std] heads, fully fused."""
    # Cast x to bf16 in-kernel (cheap VPU op, avoids a wrapper-side XLA cast).
    x = x_ref[...].astype(jnp.bfloat16)
    h = jnp.dot(x, w1_ref[...], preferred_element_type=jnp.float32) + b1_ref[...]
    h = jnp.maximum(h, 0.0)
    h = jnp.dot(h.astype(jnp.bfloat16), w2_ref[...],
                preferred_element_type=jnp.float32) + b2_ref[...]
    h = jnp.maximum(h, 0.0)
    h = jnp.dot(h.astype(jnp.bfloat16), w3_ref[...],
                preferred_element_type=jnp.float32) + b3_ref[...]
    h = jnp.maximum(h, 0.0)

    # Fused heads: one MXU matmul produces [ mean | log_std ] packed into a
    # single lane-dense slab of width 2*half (multiple of 128 lanes).
    head = jnp.dot(h.astype(jnp.bfloat16), wh_ref[...],
                   preferred_element_type=jnp.float32) + bh_ref[...]

    # Lane-iota select: mean where col < half, std = exp(clamp(log_std,-20,2))
    # where col >= half.  One full-width unmasked store; clamp->exp is bounded
    # so padded/garbage lanes can never produce NaN/Inf.
    col = lax.broadcasted_iota(jnp.int32, head.shape, dimension=1)
    std = jnp.exp(jnp.clip(head, -20.0, 2.0))
    out_ref[...] = jnp.where(col >= half, std, head).astype(out_ref.dtype)


def prepare_kernel_params(params):
    """Fuse the two heads into one lane-dense [hidden, 2*half] slab, cast to bf16."""
    hidden, out_dim = params["wm"].shape
    # 2*half is a multiple of 128 lanes; a single 128-lane slab for out_dim<=64.
    half = _round_up(out_dim, 64)

    wh = jnp.zeros((hidden, 2 * half), jnp.float32)
    wh = wh.at[:, :out_dim].set(params["wm"])
    wh = wh.at[:, half:half + out_dim].set(params["ws"])
    bh = jnp.zeros((1, 2 * half), jnp.float32)
    bh = bh.at[:, :out_dim].set(params["bm"])
    bh = bh.at[:, half:half + out_dim].set(params["bs"])

    return {
        "w1": params["w1"].astype(jnp.bfloat16), "b1": params["b1"],
        "w2": params["w2"].astype(jnp.bfloat16), "b2": params["b2"],
        "w3": params["w3"].astype(jnp.bfloat16), "b3": params["b3"],
        "wh": wh.astype(jnp.bfloat16), "bh": bh,
        "out_dim": out_dim, "half": half,
    }


def actor_forward(state, kparams, *, tb=2048):
    """Fused ActorNetwork forward. Returns (mean, std)."""
    B, in_dim = state.shape
    out_dim = kparams["out_dim"]
    half = kparams["half"]
    nh = 2 * half

    # One big batch tile if possible (kernel is step-overhead bound, not
    # compute/VMEM bound); keep it a multiple of 16 for bf16 sublane packing.
    tb = min(_round_up(tb, 16), _round_up(B, 16))
    grid_steps = pl.cdiv(B, tb)

    w1, b1 = kparams["w1"], kparams["b1"]
    w2, b2 = kparams["w2"], kparams["b2"]
    w3, b3 = kparams["w3"], kparams["b3"]
    wh, bh = kparams["wh"], kparams["bh"]
    hidden = w1.shape[1]

    def tile_map(i):
        return (i, 0)

    def const_map(i):          # weights/biases: constant block, VMEM-resident
        return (0, 0)

    in_specs = [
        pl.BlockSpec((tb, in_dim), tile_map),
        pl.BlockSpec(w1.shape, const_map),
        pl.BlockSpec(b1.shape, const_map),
        pl.BlockSpec(w2.shape, const_map),
        pl.BlockSpec(b2.shape, const_map),
        pl.BlockSpec(w3.shape, const_map),
        pl.BlockSpec(b3.shape, const_map),
        pl.BlockSpec(wh.shape, const_map),
        pl.BlockSpec(bh.shape, const_map),
    ]
    out_specs = pl.BlockSpec((tb, nh), tile_map)

    # Only ask for megacore sharding when each TensorCore gets a substantial
    # slab; otherwise duplicating weight DMAs into both v7x cores costs more
    # than it gains.  On v5e/v6e (1 TC) this choice is a measured no-op.
    semantics = ("parallel",) if (grid_steps >= 2 and tb >= 512) else ("arbitrary",)

    weight_bytes = sum(int(a.size) * a.dtype.itemsize
                       for a in (w1, b1, w2, b2, w3, b3, wh, bh))
    cost = pl.CostEstimate(
        flops=2 * B * (in_dim * hidden + 2 * hidden * hidden + hidden * nh),
        transcendentals=B * nh,
        bytes_accessed=int(state.size) * state.dtype.itemsize
        + weight_bytes + B * nh * 4,
    )

    out = pl.pallas_call(
        functools.partial(actor_kernel, half=half),
        out_shape=jax.ShapeDtypeStruct((B, nh), jnp.float32),
        grid=(grid_steps,),
        in_specs=in_specs,
        out_specs=out_specs,
        compiler_params=pltpu.CompilerParams(dimension_semantics=semantics),
        cost_estimate=cost,
    )(state, w1, b1, w2, b2, w3, b3, wh, bh)

    mean = out[:, :out_dim]
    std = out[:, half:half + out_dim]
    return mean, std


def xavier_uniform(key, fan_in, fan_out):
    # Matches torch.nn.init.xavier_uniform_ (gain=1); stored transposed
    # relative to PyTorch: [in_features, out_features].
    limit = math.sqrt(6.0 / (fan_in + fan_out))
    return jax.random.uniform(key, (fan_in, fan_out), jnp.float32, -limit, limit)


def init_actor_params(key, input_dim, output_dim, hidden_dim=128):
    ks = jax.random.split(key, 5)
    return {
        "w1": xavier_uniform(ks[0], input_dim, hidden_dim),
        "b1": jnp.zeros((1, hidden_dim), jnp.float32),
        "w2": xavier_uniform(ks[1], hidden_dim, hidden_dim),
        "b2": jnp.zeros((1, hidden_dim), jnp.float32),
        "w3": xavier_uniform(ks[2], hidden_dim, hidden_dim),
        "b3": jnp.zeros((1, hidden_dim), jnp.float32),
        "wm": xavier_uniform(ks[3], hidden_dim, output_dim),
        "bm": jnp.zeros((1, output_dim), jnp.float32),
        "ws": xavier_uniform(ks[4], hidden_dim, output_dim),
        # nn.init.constant_(self.log_std.bias, -0.5)
        "bs": jnp.full((1, output_dim), -0.5, jnp.float32),
    }


def actor_forward_ref(state, params):
    """Plain-JAX reference with the same bf16-matmul / f32-accumulate numerics."""
    def mm(a, w):
        return jnp.dot(a.astype(jnp.bfloat16), w.astype(jnp.bfloat16),
                       preferred_element_type=jnp.float32)
    h = jax.nn.relu(mm(state, params["w1"]) + params["b1"])
    h = jax.nn.relu(mm(h, params["w2"]) + params["b2"])
    h = jax.nn.relu(mm(h, params["w3"]) + params["b3"])
    mean = mm(h, params["wm"]) + params["bm"]
    log_std = jnp.clip(mm(h, params["ws"]) + params["bs"], -20.0, 2.0)
    return mean, jnp.exp(log_std)


if __name__ == "__main__":
    key = jax.random.PRNGKey(0)
    k_params, k_state = jax.random.split(key)

    B, INPUT_DIM, OUTPUT_DIM, HIDDEN_DIM = 256, 16, 8, 128

    params = init_actor_params(k_params, INPUT_DIM, OUTPUT_DIM, HIDDEN_DIM)
    kparams = prepare_kernel_params(params)
    state = jax.random.normal(k_state, (B, INPUT_DIM), jnp.float32)

    # Default tb -> single grid step, one 128-lane output slab, no wrapper pad.
    mean, std = actor_forward(state, kparams)
    jax.block_until_ready((mean, std))

    mean_ref, std_ref = actor_forward_ref(state, params)
    assert mean.shape == (B, OUTPUT_DIM) and std.shape == (B, OUTPUT_DIM)
    assert jnp.allclose(mean, mean_ref, atol=2e-3, rtol=2e-3)
    assert jnp.allclose(std, std_ref, atol=2e-3, rtol=2e-3)
    assert bool(jnp.all(std > 0.0))

    print("KERNEL_OK")
</pallas_src>

<mosaic_0001>
module attributes {stable_mosaic.version = 11 : i64} {
  func.func @actor_kernel(%arg0: i32, %arg1: memref<256x16xf32, #tpu.memory_space<vmem>>, %arg2: memref<16x128xbf16, #tpu.memory_space<vmem>>, %arg3: memref<1x128xf32, #tpu.memory_space<vmem>>, %arg4: memref<128x128xbf16, #tpu.memory_space<vmem>>, %arg5: memref<1x128xf32, #tpu.memory_space<vmem>>, %arg6: memref<128x128xbf16, #tpu.memory_space<vmem>>, %arg7: memref<1x128xf32, #tpu.memory_space<vmem>>, %arg8: memref<128x128xbf16, #tpu.memory_space<vmem>>, %arg9: memref<1x128xf32, #tpu.memory_space<vmem>>, %arg10: memref<256x128xf32, #tpu.memory_space<vmem>>) attributes {dimension_semantics = [#tpu.dimension_semantics<arbitrary>], iteration_bounds = array<i64: 1>, scalar_prefetch = 0 : i64, scratch_operands = 0 : i64, tpu.core_type = #tpu.core_type<tc>, window_params = [{transform_indices = @transform_0, window_bounds = array<i64: 256, 16>}, {pipeline_mode = #tpu.pipeline_mode<synchronous>, transform_indices = @transform_1, window_bounds = array<i64: 16, 128>}, {pipeline_mode = #tpu.pipeline_mode<synchronous>, transform_indices = @transform_2, window_bounds = array<i64: 1, 128>}, {pipeline_mode = #tpu.pipeline_mode<synchronous>, transform_indices = @transform_3, window_bounds = array<i64: 128, 128>}, {pipeline_mode = #tpu.pipeline_mode<synchronous>, transform_indices = @transform_4, window_bounds = array<i64: 1, 128>}, {pipeline_mode = #tpu.pipeline_mode<synchronous>, transform_indices = @transform_5, window_bounds = array<i64: 128, 128>}, {pipeline_mode = #tpu.pipeline_mode<synchronous>, transform_indices = @transform_6, window_bounds = array<i64: 1, 128>}, {pipeline_mode = #tpu.pipeline_mode<synchronous>, transform_indices = @transform_7, window_bounds = array<i64: 128, 128>}, {pipeline_mode = #tpu.pipeline_mode<synchronous>, transform_indices = @transform_8, window_bounds = array<i64: 1, 128>}, {transform_indices = @transform_9, window_bounds = array<i64: 256, 128>}]} {
    %c0 = arith.constant 0 : index
    %c0_0 = arith.constant 0 : index
    %0 = vector.load %arg1[%c0, %c0_0] : memref<256x16xf32, #tpu.memory_space<vmem>>, vector<256x16xf32>
    %1 = arith.truncf %0 : vector<256x16xf32> to vector<256x16xbf16>
    %c0_1 = arith.constant 0 : index
    %c0_2 = arith.constant 0 : index
    %2 = vector.load %arg2[%c0_1, %c0_2] : memref<16x128xbf16, #tpu.memory_space<vmem>>, vector<16x128xbf16>
    %cst = arith.constant dense<0.000000e+00> : vector<256x128xf32>
    %3 = tpu.matmul %1, %2, %cst {dimension_numbers = #tpu.dot_dimension_numbers<[1], [0], [0], [1], [0, 0, 1, 1], [], []>} : vector<256x16xbf16>, vector<16x128xbf16>, vector<256x128xf32> -> vector<256x128xf32>
    %c0_3 = arith.constant 0 : index
    %c0_4 = arith.constant 0 : index
    %4 = vector.load %arg3[%c0_3, %c0_4] : memref<1x128xf32, #tpu.memory_space<vmem>>, vector<1x128xf32>
    %5 = vector.broadcast %4 : vector<1x128xf32> to vector<256x128xf32>
    %6 = arith.addf %3, %5 : vector<256x128xf32>
    %cst_5 = arith.constant 0.000000e+00 : f32
    %7 = vector.broadcast %cst_5 : f32 to vector<256x128xf32>
    %8 = arith.maximumf %6, %7 : vector<256x128xf32>
    %9 = arith.truncf %8 : vector<256x128xf32> to vector<256x128xbf16>
    %c0_6 = arith.constant 0 : index
    %c0_7 = arith.constant 0 : index
    %10 = vector.load %arg4[%c0_6, %c0_7] : memref<128x128xbf16, #tpu.memory_space<vmem>>, vector<128x128xbf16>
    %cst_8 = arith.constant dense<0.000000e+00> : vector<256x128xf32>
    %11 = tpu.matmul %9, %10, %cst_8 {dimension_numbers = #tpu.dot_dimension_numbers<[1], [0], [0], [1], [0, 0, 1, 1], [], []>} : vector<256x128xbf16>, vector<128x128xbf16>, vector<256x128xf32> -> vector<256x128xf32>
    %c0_9 = arith.constant 0 : index
    %c0_10 = arith.constant 0 : index
    %12 = vector.load %arg5[%c0_9, %c0_10] : memref<1x128xf32, #tpu.memory_space<vmem>>, vector<1x128xf32>
    %13 = vector.broadcast %12 : vector<1x128xf32> to vector<256x128xf32>
    %14 = arith.addf %11, %13 : vector<256x128xf32>
    %cst_11 = arith.constant 0.000000e+00 : f32
    %15 = vector.broadcast %cst_11 : f32 to vector<256x128xf32>
    %16 = arith.maximumf %14, %15 : vector<256x128xf32>
    %17 = arith.truncf %16 : vector<256x128xf32> to vector<256x128xbf16>
    %c0_12 = arith.constant 0 : index
    %c0_13 = arith.constant 0 : index
    %18 = vector.load %arg6[%c0_12, %c0_13] : memref<128x128xbf16, #tpu.memory_space<vmem>>, vector<128x128xbf16>
    %cst_14 = arith.constant dense<0.000000e+00> : vector<256x128xf32>
    %19 = tpu.matmul %17, %18, %cst_14 {dimension_numbers = #tpu.dot_dimension_numbers<[1], [0], [0], [1], [0, 0, 1, 1], [], []>} : vector<256x128xbf16>, vector<128x128xbf16>, vector<256x128xf32> -> vector<256x128xf32>
    %c0_15 = arith.constant 0 : index
    %c0_16 = arith.constant 0 : index
    %20 = vector.load %arg7[%c0_15, %c0_16] : memref<1x128xf32, #tpu.memory_space<vmem>>, vector<1x128xf32>
    %21 = vector.broadcast %20 : vector<1x128xf32> to vector<256x128xf32>
    %22 = arith.addf %19, %21 : vector<256x128xf32>
    %cst_17 = arith.constant 0.000000e+00 : f32
    %23 = vector.broadcast %cst_17 : f32 to vector<256x128xf32>
    %24 = arith.maximumf %22, %23 : vector<256x128xf32>
    %25 = arith.truncf %24 : vector<256x128xf32> to vector<256x128xbf16>
    %c0_18 = arith.constant 0 : index
    %c0_19 = arith.constant 0 : index
    %26 = vector.load %arg8[%c0_18, %c0_19] : memref<128x128xbf16, #tpu.memory_space<vmem>>, vector<128x128xbf16>
    %cst_20 = arith.constant dense<0.000000e+00> : vector<256x128xf32>
    %27 = tpu.matmul %25, %26, %cst_20 {dimension_numbers = #tpu.dot_dimension_numbers<[1], [0], [0], [1], [0, 0, 1, 1], [], []>} : vector<256x128xbf16>, vector<128x128xbf16>, vector<256x128xf32> -> vector<256x128xf32>
    %c0_21 = arith.constant 0 : index
    %c0_22 = arith.constant 0 : index
    %28 = vector.load %arg9[%c0_21, %c0_22] : memref<1x128xf32, #tpu.memory_space<vmem>>, vector<1x128xf32>
    %29 = vector.broadcast %28 : vector<1x128xf32> to vector<256x128xf32>
    %30 = arith.addf %27, %29 : vector<256x128xf32>
    %31 = tpu.iota {dimensions = array<i32: 1>} : vector<256x128xi32>
    %cst_23 = arith.constant -2.000000e+01 : f32
    %cst_24 = arith.constant 2.000000e+00 : f32
    %32 = vector.broadcast %cst_23 : f32 to vector<256x128xf32>
    %33 = arith.maximumf %32, %30 : vector<256x128xf32>
    %34 = vector.broadcast %cst_24 : f32 to vector<256x128xf32>
    %35 = arith.minimumf %34, %33 : vector<256x128xf32>
    %36 = math.exp %35 : vector<256x128xf32>
    %c64_i32 = arith.constant 64 : i32
    %37 = vector.broadcast %c64_i32 : i32 to vector<256x128xi32>
    %38 = arith.cmpi sge, %31, %37 : vector<256x128xi32>
    %39 = arith.select %38, %36, %30 : vector<256x128xi1>, vector<256x128xf32>
    %c0_25 = arith.constant 0 : index
    %c0_26 = arith.constant 0 : index
    %40 = vector.load %arg10[%c0_25, %c0_26] : memref<256x128xf32, #tpu.memory_space<vmem>>, vector<256x128xf32>
    tpu.vector_store %arg10[%c0_25, %c0_26], %39 {strides = array<i32>} : memref<256x128xf32, #tpu.memory_space<vmem>>, vector<256x128xf32>,
    return
  }
  func.func @transform_0(%arg0: i32) -> (i32, i32) {
    %c0_i32 = arith.constant 0 : i32
    %c0_i32_0 = arith.constant 0 : i32
    return %arg0, %c0_i32 : i32, i32
  }
  func.func @transform_1(%arg0: i32) -> (i32, i32) {
    %c0_i32 = arith.constant 0 : i32
    %c0_i32_0 = arith.constant 0 : i32
    %c0_i32_1 = arith.constant 0 : i32
    return %c0_i32, %c0_i32_0 : i32, i32
  }
  func.func @transform_2(%arg0: i32) -> (i32, i32) {
    %c0_i32 = arith.constant 0 : i32
    %c0_i32_0 = arith.constant 0 : i32
    %c0_i32_1 = arith.constant 0 : i32
    return %c0_i32, %c0_i32_0 : i32, i32
  }
  func.func @transform_3(%arg0: i32) -> (i32, i32) {
    %c0_i32 = arith.constant 0 : i32
    %c0_i32_0 = arith.constant 0 : i32
    %c0_i32_1 = arith.constant 0 : i32
    return %c0_i32, %c0_i32_0 : i32, i32
  }
  func.func @transform_4(%arg0: i32) -> (i32, i32) {
    %c0_i32 = arith.constant 0 : i32
    %c0_i32_0 = arith.constant 0 : i32
    %c0_i32_1 = arith.constant 0 : i32
    return %c0_i32, %c0_i32_0 : i32, i32
  }
  func.func @transform_5(%arg0: i32) -> (i32, i32) {
    %c0_i32 = arith.constant 0 : i32
    %c0_i32_0 = arith.constant 0 : i32
    %c0_i32_1 = arith.constant 0 : i32
    return %c0_i32, %c0_i32_0 : i32, i32
  }
  func.func @transform_6(%arg0: i32) -> (i32, i32) {
    %c0_i32 = arith.constant 0 : i32
    %c0_i32_0 = arith.constant 0 : i32
    %c0_i32_1 = arith.constant 0 : i32
    return %c0_i32, %c0_i32_0 : i32, i32
  }
  func.func @transform_7(%arg0: i32) -> (i32, i32) {
    %c0_i32 = arith.constant 0 : i32
    %c0_i32_0 = arith.constant 0 : i32
    %c0_i32_1 = arith.constant 0 : i32
    return %c0_i32, %c0_i32_0 : i32, i32
  }
  func.func @transform_8(%arg0: i32) -> (i32, i32) {
    %c0_i32 = arith.constant 0 : i32
    %c0_i32_0 = arith.constant 0 : i32
    %c0_i32_1 = arith.constant 0 : i32
    return %c0_i32, %c0_i32_0 : i32, i32
  }
  func.func @transform_9(%arg0: i32) -> (i32, i32) {
    %c0_i32 = arith.constant 0 : i32
    %c0_i32_0 = arith.constant 0 : i32
    return %arg0, %c0_i32 : i32, i32
  }
}

</mosaic_0001>

<llo_original>
// kernel: tpu_custom_call.1
$region0: #{tpu_custom_call.1}
  #allocation0 [shape = 'u32[]', space=smem, size = 0x4, offset = 0x4, fixed_abs, tag = 'smem constant byte address 0x4 - core index']
  #allocation1 [shape = 'u32[72,128]{1,0:T(1,128)}', space=vmem, size = 0x9000, scoped, tag = 'internal scratch']
  %s0 = inlined_call_operand.vmem [shape: f32[256,16], index: 0, kind: input, shape index: {}]
  %s1 = inlined_call_operand.vmem [shape: bf16[16,128], index: 1, kind: input, shape index: {}]
  %s2 = inlined_call_operand.vmem [shape: f32[1,128], index: 2, kind: input, shape index: {}]
  %s3 = inlined_call_operand.vmem [shape: bf16[128,128], index: 3, kind: input, shape index: {}]
  %s4 = inlined_call_operand.vmem [shape: f32[1,128], index: 4, kind: input, shape index: {}]
  %s5 = inlined_call_operand.vmem [shape: bf16[128,128], index: 5, kind: input, shape index: {}]
  %s6 = inlined_call_operand.vmem [shape: f32[1,128], index: 6, kind: input, shape index: {}]
  %s7 = inlined_call_operand.vmem [shape: bf16[128,128], index: 7, kind: input, shape index: {}]
  %s8 = inlined_call_operand.vmem [shape: f32[1,128], index: 8, kind: input, shape index: {}]
  %s9 = inlined_call_operand.hbm [shape: f32[256,128], index: 9, kind: output, shape index: {}]
  %s10 = sld [smem:[#allocation0]]
  $region46: #{tpu_custom_call.1} parent=0
    _
  %s12 = ssub.s32 1, %s10
  %s13 = scalar_select 0, %s12, %s10
  $region1: #{tpu_custom_call.1} parent=0
    #allocation2 [shape = 'u8[131072]{0}', space=vmem, size = 0x20000, scoped, tag = 'output window, operand 0, single buffered']
    #allocation3 [shape = 's32[1]{0}', space=sflag, size = 0x4, scoped, tag = 'scoped memory for tpu_custom_call.1']
    %14 = vsyncpa [#allocation3], 0
    // Predicated region
    $region2: #{tpu_custom_call.1} parent=1 // pred_check
      _
    $region3: #{tpu_custom_call.1} parent=1 // pred_check_branch
      %16 = sbr.rel (0) target = $region5
    $region4: #{tpu_custom_call.1} parent=1 // pred_region
      _
    $region5: #{tpu_custom_call.1} parent=1 // pred_fallthru
      _
    // Predicated region
    $region6: #{tpu_custom_call.1} parent=1 // pred_check
      _
    $region7: #{tpu_custom_call.1} parent=1 // pred_check_branch
      %18 = sbr.rel (0) target = $region9
    $region8: #{tpu_custom_call.1} parent=1 // pred_region
      _
    $region9: #{tpu_custom_call.1} parent=1 // pred_fallthru
      _
    // Predicated region
    $region10: #{tpu_custom_call.1} parent=1 // pred_check
      _
    $region11: #{tpu_custom_call.1} parent=1 // pred_check_branch
      %20 = sbr.rel (0) target = $region13
    $region12: #{tpu_custom_call.1} parent=1 // pred_region
      _
    $region13: #{tpu_custom_call.1} parent=1 // pred_fallthru
      _
    // Predicated region
    $region14: #{tpu_custom_call.1} parent=1 // pred_check
      _
    $region15: #{tpu_custom_call.1} parent=1 // pred_check_branch
      %22 = sbr.rel (0) target = $region17
    $region16: #{tpu_custom_call.1} parent=1 // pred_region
      _
    $region17: #{tpu_custom_call.1} parent=1 // pred_fallthru
      _
    // Predicated region
    $region18: #{tpu_custom_call.1} parent=1 // pred_check
      _
    $region19: #{tpu_custom_call.1} parent=1 // pred_check_branch
      %24 = sbr.rel (0) target = $region21
    $region20: #{tpu_custom_call.1} parent=1 // pred_region
      _
    $region21: #{tpu_custom_call.1} parent=1 // pred_fallthru
      _
    // Predicated region
    $region22: #{tpu_custom_call.1} parent=1 // pred_check
      _
    $region23: #{tpu_custom_call.1} parent=1 // pred_check_branch
      %26 = sbr.rel (0) target = $region25
    $region24: #{tpu_custom_call.1} parent=1 // pred_region
      _
    $region25: #{tpu_custom_call.1} parent=1 // pred_fallthru
      _
    // Predicated region
    $region26: #{tpu_custom_call.1} parent=1 // pred_check
      _
    $region27: #{tpu_custom_call.1} parent=1 // pred_check_branch
      %28 = sbr.rel (0) target = $region29
    $region28: #{tpu_custom_call.1} parent=1 // pred_region
      _
    $region29: #{tpu_custom_call.1} parent=1 // pred_fallthru
      _
    // Predicated region
    $region30: #{tpu_custom_call.1} parent=1 // pred_check
      _
    $region31: #{tpu_custom_call.1} parent=1 // pred_check_branch
      %30 = sbr.rel (0) target = $region33
    $region32: #{tpu_custom_call.1} parent=1 // pred_region
      _
    $region33: #{tpu_custom_call.1} parent=1 // pred_fallthru
      _
    // Predicated region
    $region34: #{tpu_custom_call.1} parent=1 // pred_check
      _
    $region35: #{tpu_custom_call.1} parent=1 // pred_check_branch
      %32 = sbr.rel (0) target = $region37
    $region36: #{tpu_custom_call.1} parent=1 // pred_region
      _
    $region37: #{tpu_custom_call.1} parent=1 // pred_fallthru
      _
    %v34 = vld [vmem:[%s0] sm:$0xff]
    %v35 = vld [vmem:[%s0 + $0x8] sm:$0xff]
    %v36 = vld [vmem:[%s0 + $0x10] sm:$0xff]
    %v37 = vld [vmem:[%s0 + $0x18] sm:$0xff]
    %v38 = vld [vmem:[%s0 + $0x20] sm:$0xff]
    %v39 = vld [vmem:[%s0 + $0x28] sm:$0xff]
    %v40 = vld [vmem:[%s0 + $0x30] sm:$0xff]
    %v41 = vld [vmem:[%s0 + $0x38] sm:$0xff]
    %v42 = vld [vmem:[%s0 + $0x40] sm:$0xff]
    %v43 = vld [vmem:[%s0 + $0x48] sm:$0xff]
    %v44 = vld [vmem:[%s0 + $0x50] sm:$0xff]
    %v45 = vld [vmem:[%s0 + $0x58] sm:$0xff]
    %v46 = vld [vmem:[%s0 + $0x60] sm:$0xff]
    %v47 = vld [vmem:[%s0 + $0x68] sm:$0xff]
    %v48 = vld [vmem:[%s0 + $0x70] sm:$0xff]
    %v49 = vld [vmem:[%s0 + $0x78] sm:$0xff]
    %v50 = vld [vmem:[%s0 + $0x80] sm:$0xff]
    %v51 = vld [vmem:[%s0 + $0x88] sm:$0xff]
    %v52 = vld [vmem:[%s0 + $0x90] sm:$0xff]
    %v53 = vld [vmem:[%s0 + $0x98] sm:$0xff]
    %v54 = vld [vmem:[%s0 + $0xa0] sm:$0xff]
    %v55 = vld [vmem:[%s0 + $0xa8] sm:$0xff]
    %v56 = vld [vmem:[%s0 + $0xb0] sm:$0xff]
    %v57 = vld [vmem:[%s0 + $0xb8] sm:$0xff]
    %v58 = vld [vmem:[%s0 + $0xc0] sm:$0xff]
    %v59 = vld [vmem:[%s0 + $0xc8] sm:$0xff]
    %v60 = vld [vmem:[%s0 + $0xd0] sm:$0xff]
    %v61 = vld [vmem:[%s0 + $0xd8] sm:$0xff]
    %v62 = vld [vmem:[%s0 + $0xe0] sm:$0xff]
    %v63 = vld [vmem:[%s0 + $0xe8] sm:$0xff]
    %v64 = vld [vmem:[%s0 + $0xf0] sm:$0xff]
    %v65 = vld [vmem:[%s0 + $0xf8] sm:$0xff]
    %v66 = vpack.c.bf16 %v35, %v34
    %v67 = vpack.c.bf16 %v37, %v36
    %v68 = vpack.c.bf16 %v39, %v38
    %v69 = vpack.c.bf16 %v41, %v40
    %v70 = vpack.c.bf16 %v43, %v42
    %v71 = vpack.c.bf16 %v45, %v44
    %v72 = vpack.c.bf16 %v47, %v46
    %v73 = vpack.c.bf16 %v49, %v48
    %v74 = vpack.c.bf16 %v51, %v50
    %v75 = vpack.c.bf16 %v53, %v52
    %v76 = vpack.c.bf16 %v55, %v54
    %v77 = vpack.c.bf16 %v57, %v56
    %v78 = vpack.c.bf16 %v59, %v58
    %v79 = vpack.c.bf16 %v61, %v60
    %v80 = vpack.c.bf16 %v63, %v62
    %v81 = vpack.c.bf16 %v65, %v64
    %v82 = vld [vmem:[%s1] sm:$0xf]
    %v83 = vld [vmem:[%s1 + $0x4] sm:$0xf]
    %v84 = vld [vmem:[%s2] sm:$0x1]
    %v86 = vperm.slane %v84, 0
    %v90 = vunpack.c.l.b16 %v82
    %v91 = vunpack.c.l.b16 %v83
    %v92 = vpack.c.b16 %v91, %v90
    %vm94 = vcmask 130048
    %v96 = vsel %vm94, %v66, 0
    %v99 = vsel %vm94, %v67, 0
    %v102 = vsel %vm94, %v68, 0
    %v105 = vsel %vm94, %v69, 0
    %v108 = vsel %vm94, %v70, 0
    %v111 = vsel %vm94, %v71, 0
    %v114 = vsel %vm94, %v72, 0
    %v117 = vsel %vm94, %v73, 0
    %v120 = vsel %vm94, %v74, 0
    %v123 = vsel %vm94, %v75, 0
    %v126 = vsel %vm94, %v76, 0
    %v129 = vsel %vm94, %v77, 0
    %v132 = vsel %vm94, %v78, 0
    %v135 = vsel %vm94, %v79, 0
    %v138 = vsel %vm94, %v80, 0
    %v141 = vsel %vm94, %v81, 0
    %143 = vmatpush.bf16.msra.mxu0 0
    %144 = vmatpush.bf16.msra.mxu0 0
    %145 = vmatpush.bf16.msra.mxu0 0
    %146 = vmatpush.bf16.msra.mxu0 0
    %147 = vmatpush.bf16.msra.mxu0 0
    %148 = vmatpush.bf16.msra.mxu0 0
    %149 = vmatpush.bf16.msra.mxu0 0
    %150 = vmatpush.bf16.msra.mxu0 %v92
    %151 = vmatmul.bf16.gmra.mxu0 %v96
    %v152 = vpop.f32.mrf.mxu0
    %v153 = vadd.f32 %v86, %v152
    %v154 = vpop.f32.mrf.mxu0
    %v155 = vadd.f32 %v86, %v154
    %156 = vmatmul.bf16.gmra.mxu0 %v99
    %v157 = vpop.f32.mrf.mxu0
    %v158 = vadd.f32 %v86, %v157
    %v159 = vpop.f32.mrf.mxu0
    %v160 = vadd.f32 %v86, %v159
    %161 = vmatmul.bf16.gmra.mxu0 %v102
    %v162 = vpop.f32.mrf.mxu0
    %v163 = vadd.f32 %v86, %v162
    %v164 = vpop.f32.mrf.mxu0
    %v165 = vadd.f32 %v86, %v164
    %166 = vmatmul.bf16.gmra.mxu0 %v105
    %v167 = vpop.f32.mrf.mxu0
    %v168 = vadd.f32 %v86, %v167
    %v169 = vpop.f32.mrf.mxu0
    %v170 = vadd.f32 %v86, %v169
    %171 = vmatmul.bf16.gmra.mxu0 %v108
    %v172 = vpop.f32.mrf.mxu0
    %v173 = vadd.f32 %v86, %v172
    %v174 = vpop.f32.mrf.mxu0
    %v175 = vadd.f32 %v86, %v174
    %176 = vmatmul.bf16.gmra.mxu0 %v111
    %v177 = vpop.f32.mrf.mxu0
    %v178 = vadd.f32 %v86, %v177
    %v179 = vpop.f32.mrf.mxu0
    %v180 = vadd.f32 %v86, %v179
    %181 = vmatmul.bf16.gmra.mxu0 %v114
    %v182 = vpop.f32.mrf.mxu0
    %v183 = vadd.f32 %v86, %v182
    %v184 = vpop.f32.mrf.mxu0
    %v185 = vadd.f32 %v86, %v184
    %186 = vmatmul.bf16.gmra.mxu0 %v117
    %v187 = vpop.f32.mrf.mxu0
    %v188 = vadd.f32 %v86, %v187
    %v189 = vpop.f32.mrf.mxu0
    %v190 = vadd.f32 %v86, %v189
    %191 = vmatmul.bf16.gmra.mxu0 %v120
    %v192 = vpop.f32.mrf.mxu0
    %v193 = vadd.f32 %v86, %v192
    %v194 = vpop.f32.mrf.mxu0
    %v195 = vadd.f32 %v86, %v194
    %196 = vmatmul.bf16.gmra.mxu0 %v123
    %v197 = vpop.f32.mrf.mxu0
    %v198 = vadd.f32 %v86, %v197
    %v199 = vpop.f32.mrf.mxu0
    %v200 = vadd.f32 %v86, %v199
    %201 = vmatmul.bf16.gmra.mxu0 %v126
    %v202 = vpop.f32.mrf.mxu0
    %v203 = vadd.f32 %v86, %v202
    %v204 = vpop.f32.mrf.mxu0
    %v205 = vadd.f32 %v86, %v204
    %206 = vmatmul.bf16.gmra.mxu0 %v129
    %v207 = vpop.f32.mrf.mxu0
    %v208 = vadd.f32 %v86, %v207
    %v209 = vpop.f32.mrf.mxu0
    %v210 = vadd.f32 %v86, %v209
    %211 = vmatmul.bf16.gmra.mxu0 %v132
    %v212 = vpop.f32.mrf.mxu0
    %v213 = vadd.f32 %v86, %v212
    %v214 = vpop.f32.mrf.mxu0
    %v215 = vadd.f32 %v86, %v214
    %216 = vmatmul.bf16.gmra.mxu0 %v135
    %v217 = vpop.f32.mrf.mxu0
    %v218 = vadd.f32 %v86, %v217
    %v219 = vpop.f32.mrf.mxu0
    %v220 = vadd.f32 %v86, %v219
    %221 = vmatmul.bf16.gmra.mxu0 %v138
    %v222 = vpop.f32.mrf.mxu0
    %v223 = vadd.f32 %v86, %v222
    %v224 = vpop.f32.mrf.mxu0
    %v225 = vadd.f32 %v86, %v224
    %226 = vmatmul.bf16.gmra.mxu0 %v141
    %v227 = vpop.f32.mrf.mxu0
    %v228 = vadd.f32 %v86, %v227
    %v229 = vpop.f32.mrf.mxu0
    %v230 = vadd.f32 %v86, %v229
    %231 = vdwg.mxu0
    %v232 = vmax.f32 %v153, 0.0
    %v233 = vmax.f32 %v155, 0.0
    %v234 = vmax.f32 %v158, 0.0
    %v235 = vmax.f32 %v160, 0.0
    %v236 = vmax.f32 %v163, 0.0
    %v237 = vmax.f32 %v165, 0.0
    %v238 = vmax.f32 %v168, 0.0
    %v239 = vmax.f32 %v170, 0.0
    %v240 = vmax.f32 %v173, 0.0
    %v241 = vmax.f32 %v175, 0.0
    %v242 = vmax.f32 %v178, 0.0
    %v243 = vmax.f32 %v180, 0.0
    %v244 = vmax.f32 %v183, 0.0
    %v245 = vmax.f32 %v185, 0.0
    %v246 = vmax.f32 %v188, 0.0
    %v247 = vmax.f32 %v190, 0.0
    %v248 = vmax.f32 %v193, 0.0
    %v249 = vmax.f32 %v195, 0.0
    %v250 = vmax.f32 %v198, 0.0
    %v251 = vmax.f32 %v200, 0.0
    %v252 = vmax.f32 %v203, 0.0
    %v253 = vmax.f32 %v205, 0.0
    %v254 = vmax.f32 %v208, 0.0
    %v255 = vmax.f32 %v210, 0.0
    %v256 = vmax.f32 %v213, 0.0
    %v257 = vmax.f32 %v215, 0.0
    %v258 = vmax.f32 %v218, 0.0
    %v259 = vmax.f32 %v220, 0.0
    %v260 = vmax.f32 %v223, 0.0
    %v261 = vmax.f32 %v225, 0.0
    %v262 = vmax.f32 %v228, 0.0
    %v263 = vmax.f32 %v230, 0.0
    %v264 = vpack.c.bf16 %v233, %v232
    %v265 = vpack.c.bf16 %v235, %v234
    %v266 = vpack.c.bf16 %v237, %v236
    %v267 = vpack.c.bf16 %v239, %v238
    %v268 = vpack.c.bf16 %v241, %v240
    %v269 = vpack.c.bf16 %v243, %v242
    %v270 = vpack.c.bf16 %v245, %v244
    %v271 = vpack.c.bf16 %v247, %v246
    %v272 = vpack.c.bf16 %v249, %v248
    %v273 = vpack.c.bf16 %v251, %v250
    %v274 = vpack.c.bf16 %v253, %v252
    %v275 = vpack.c.bf16 %v255, %v254
    %v276 = vpack.c.bf16 %v257, %v256
    %v277 = vpack.c.bf16 %v259, %v258
    %v278 = vpack.c.bf16 %v261, %v260
    %v279 = vpack.c.bf16 %v263, %v262
    %v280 = vld [vmem:[%s3] sm:$0xf]
    %v281 = vld [vmem:[%s3 + $0x4] sm:$0xf]
    %v282 = vld [vmem:[%s3 + $0x8] sm:$0xf]
    %v283 = vld [vmem:[%s3 + $0xc] sm:$0xf]
    %v284 = vld [vmem:[%s3 + $0x10] sm:$0xf]
    %v285 = vld [vmem:[%s3 + $0x14] sm:$0xf]
    %v286 = vld [vmem:[%s3 + $0x18] sm:$0xf]
    %v287 = vld [vmem:[%s3 + $0x1c] sm:$0xf]
    %v288 = vld [vmem:[%s3 + $0x20] sm:$0xf]
    %v289 = vld [vmem:[%s3 + $0x24] sm:$0xf]
    %v290 = vld [vmem:[%s3 + $0x28] sm:$0xf]
    %v291 = vld [vmem:[%s3 + $0x2c] sm:$0xf]
    %v292 = vld [vmem:[%s3 + $0x30] sm:$0xf]
    %v293 = vld [vmem:[%s3 + $0x34] sm:$0xf]
    %v294 = vld [vmem:[%s3 + $0x38] sm:$0xf]
    %v295 = vld [vmem:[%s3 + $0x3c] sm:$0xf]
    %v296 = vld [vmem:[%s4] sm:$0x1]
    %v298 = vperm.slane %v296, 0
    %v316 = vunpack.c.l.b16 %v280
    %v317 = vunpack.c.l.b16 %v281
    %v318 = vunpack.c.l.b16 %v282
    %v319 = vunpack.c.l.b16 %v283
    %v320 = vunpack.c.l.b16 %v284
    %v321 = vunpack.c.l.b16 %v285
    %v322 = vunpack.c.l.b16 %v286
    %v323 = vunpack.c.l.b16 %v287
    %v324 = vunpack.c.l.b16 %v288
    %v325 = vunpack.c.l.b16 %v289
    %v326 = vunpack.c.l.b16 %v290
    %v327 = vunpack.c.l.b16 %v291
    %v328 = vunpack.c.l.b16 %v292
    %v329 = vunpack.c.l.b16 %v293
    %v330 = vunpack.c.l.b16 %v294
    %v331 = vunpack.c.l.b16 %v295
    %v332 = vpack.c.b16 %v317, %v316
    %v333 = vpack.c.b16 %v319, %v318
    %v334 = vpack.c.b16 %v321, %v320
    %v335 = vpack.c.b16 %v323, %v322
    %v336 = vpack.c.b16 %v325, %v324
    %v337 = vpack.c.b16 %v327, %v326
    %v338 = vpack.c.b16 %v329, %v328
    %v339 = vpack.c.b16 %v331, %v330
    %348 = vmatpush.bf16.msra.mxu0 %v339
    %349 = vmatpush.bf16.msra.mxu0 %v338
    %350 = vmatpush.bf16.msra.mxu0 %v337
    %351 = vmatpush.bf16.msra.mxu0 %v336
    %352 = vmatpush.bf16.msra.mxu0 %v335
    %353 = vmatpush.bf16.msra.mxu0 %v334
    %354 = vmatpush.bf16.msra.mxu0 %v333
    %355 = vmatpush.bf16.msra.mxu0 %v332
    %356 = vmatmul.bf16.gmra.mxu0 %v264
    %v357 = vpop.f32.mrf.mxu0
    %v358 = vadd.f32 %v298, %v357
    %v359 = vpop.f32.mrf.mxu0
    %v360 = vadd.f32 %v298, %v359
    %361 = vmatmul.bf16.gmra.mxu0 %v265
    %v362 = vpop.f32.mrf.mxu0
    %v363 = vadd.f32 %v298, %v362
    %v364 = vpop.f32.mrf.mxu0
    %v365 = vadd.f32 %v298, %v364
    %366 = vmatmul.bf16.gmra.mxu0 %v266
    %v367 = vpop.f32.mrf.mxu0
    %v368 = vadd.f32 %v298, %v367
    %v369 = vpop.f32.mrf.mxu0
    %v370 = vadd.f32 %v298, %v369
    %371 = vmatmul.bf16.gmra.mxu0 %v267
    %v372 = vpop.f32.mrf.mxu0
    %v373 = vadd.f32 %v298, %v372
    %v374 = vpop.f32.mrf.mxu0
    %v375 = vadd.f32 %v298, %v374
    %376 = vmatmul.bf16.gmra.mxu0 %v268
    %v377 = vpop.f32.mrf.mxu0
    %v378 = vadd.f32 %v298, %v377
    %v379 = vpop.f32.mrf.mxu0
    %v380 = vadd.f32 %v298, %v379
    %381 = vmatmul.bf16.gmra.mxu0 %v269
    %v382 = vpop.f32.mrf.mxu0
    %v383 = vadd.f32 %v298, %v382
    %v384 = vpop.f32.mrf.mxu0
    %v385 = vadd.f32 %v298, %v384
    %386 = vmatmul.bf16.gmra.mxu0 %v270
    %v387 = vpop.f32.mrf.mxu0
    %v388 = vadd.f32 %v298, %v387
    %v389 = vpop.f32.mrf.mxu0
    %v390 = vadd.f32 %v298, %v389
    %391 = vmatmul.bf16.gmra.mxu0 %v271
    %v392 = vpop.f32.mrf.mxu0
    %v393 = vadd.f32 %v298, %v392
    %v394 = vpop.f32.mrf.mxu0
    %v395 = vadd.f32 %v298, %v394
    %396 = vmatmul.bf16.gmra.mxu0 %v272
    %v397 = vpop.f32.mrf.mxu0
    %v398 = vadd.f32 %v298, %v397
    %v399 = vpop.f32.mrf.mxu0
    %v400 = vadd.f32 %v298, %v399
    %401 = vmatmul.bf16.gmra.mxu0 %v273
    %v402 = vpop.f32.mrf.mxu0
    %v403 = vadd.f32 %v298, %v402
    %v404 = vpop.f32.mrf.mxu0
    %v405 = vadd.f32 %v298, %v404
    %406 = vmatmul.bf16.gmra.mxu0 %v274
    %v407 = vpop.f32.mrf.mxu0
    %v408 = vadd.f32 %v298, %v407
    %v409 = vpop.f32.mrf.mxu0
    %v410 = vadd.f32 %v298, %v409
    %411 = vmatmul.bf16.gmra.mxu0 %v275
    %v412 = vpop.f32.mrf.mxu0
    %v413 = vadd.f32 %v298, %v412
    %v414 = vpop.f32.mrf.mxu0
    %v415 = vadd.f32 %v298, %v414
    %416 = vmatmul.bf16.gmra.mxu0 %v276
    %v417 = vpop.f32.mrf.mxu0
    %v418 = vadd.f32 %v298, %v417
    %v419 = vpop.f32.mrf.mxu0
    %v420 = vadd.f32 %v298, %v419
    %421 = vmatmul.bf16.gmra.mxu0 %v277
    %v422 = vpop.f32.mrf.mxu0
    %v423 = vadd.f32 %v298, %v422
    %v424 = vpop.f32.mrf.mxu0
    %v425 = vadd.f32 %v298, %v424
    %426 = vmatmul.bf16.gmra.mxu0 %v278
    %v427 = vpop.f32.mrf.mxu0
    %v428 = vadd.f32 %v298, %v427
    %v429 = vpop.f32.mrf.mxu0
    %v430 = vadd.f32 %v298, %v429
    %431 = vmatmul.bf16.gmra.mxu0 %v279
    %v432 = vpop.f32.mrf.mxu0
    %v433 = vadd.f32 %v298, %v432
    %v434 = vpop.f32.mrf.mxu0
    %v435 = vadd.f32 %v298, %v434
    %436 = vdwg.mxu0
    %v437 = vmax.f32 %v358, 0.0
    %v438 = vmax.f32 %v360, 0.0
    %v439 = vmax.f32 %v363, 0.0
    %v440 = vmax.f32 %v365, 0.0
    %v441 = vmax.f32 %v368, 0.0
    %v442 = vmax.f32 %v370, 0.0
    %v443 = vmax.f32 %v373, 0.0
    %v444 = vmax.f32 %v375, 0.0
    %v445 = vmax.f32 %v378, 0.0
    %v446 = vmax.f32 %v380, 0.0
    %v447 = vmax.f32 %v383, 0.0
    %v448 = vmax.f32 %v385, 0.0
    %v449 = vmax.f32 %v388, 0.0
    %v450 = vmax.f32 %v390, 0.0
    %v451 = vmax.f32 %v393, 0.0
    %v452 = vmax.f32 %v395, 0.0
    %v453 = vmax.f32 %v398, 0.0
    %v454 = vmax.f32 %v400, 0.0
    %v455 = vmax.f32 %v403, 0.0
    %v456 = vmax.f32 %v405, 0.0
    %v457 = vmax.f32 %v408, 0.0
    %v458 = vmax.f32 %v410, 0.0
    %v459 = vmax.f32 %v413, 0.0
    %v460 = vmax.f32 %v415, 0.0
    %v461 = vmax.f32 %v418, 0.0
    %v462 = vmax.f32 %v420, 0.0
    %v463 = vmax.f32 %v423, 0.0
    %v464 = vmax.f32 %v425, 0.0
    %v465 = vmax.f32 %v428, 0.0
    %v466 = vmax.f32 %v430, 0.0
    %v467 = vmax.f32 %v433, 0.0
    %v468 = vmax.f32 %v435, 0.0
    %v469 = vpack.c.bf16 %v438, %v437
    %v470 = vpack.c.bf16 %v440, %v439
    %v471 = vpack.c.bf16 %v442, %v441
    %v472 = vpack.c.bf16 %v444, %v443
    %v473 = vpack.c.bf16 %v446, %v445
    %v474 = vpack.c.bf16 %v448, %v447
    %v475 = vpack.c.bf16 %v450, %v449
    %v476 = vpack.c.bf16 %v452, %v451
    %v477 = vpack.c.bf16 %v454, %v453
    %v478 = vpack.c.bf16 %v456, %v455
    %v479 = vpack.c.bf16 %v458, %v457
    %v480 = vpack.c.bf16 %v460, %v459
    %v481 = vpack.c.bf16 %v462, %v461
    %v482 = vpack.c.bf16 %v464, %v463
    %v483 = vpack.c.bf16 %v466, %v465
    %v484 = vpack.c.bf16 %v468, %v467
    %v485 = vld [vmem:[%s5] sm:$0xf]
    %v486 = vld [vmem:[%s5 + $0x4] sm:$0xf]
    %v487 = vld [vmem:[%s5 + $0x8] sm:$0xf]
    %v488 = vld [vmem:[%s5 + $0xc] sm:$0xf]
    %v489 = vld [vmem:[%s5 + $0x10] sm:$0xf]
    %v490 = vld [vmem:[%s5 + $0x14] sm:$0xf]
    %v491 = vld [vmem:[%s5 + $0x18] sm:$0xf]
    %v492 = vld [vmem:[%s5 + $0x1c] sm:$0xf]
    %v493 = vld [vmem:[%s5 + $0x20] sm:$0xf]
    %v494 = vld [vmem:[%s5 + $0x24] sm:$0xf]
    %v495 = vld [vmem:[%s5 + $0x28] sm:$0xf]
    %v496 = vld [vmem:[%s5 + $0x2c] sm:$0xf]
    %v497 = vld [vmem:[%s5 + $0x30] sm:$0xf]
    %v498 = vld [vmem:[%s5 + $0x34] sm:$0xf]
    %v499 = vld [vmem:[%s5 + $0x38] sm:$0xf]
    %v500 = vld [vmem:[%s5 + $0x3c] sm:$0xf]
    %v501 = vld [vmem:[%s6] sm:$0x1]
    %v503 = vperm.slane %v501, 0
    %v521 = vunpack.c.l.b16 %v485
    %v522 = vunpack.c.l.b16 %v486
    %v523 = vunpack.c.l.b16 %v487
    %v524 = vunpack.c.l.b16 %v488
    %v525 = vunpack.c.l.b16 %v489
    %v526 = vunpack.c.l.b16 %v490
    %v527 = vunpack.c.l.b16 %v491
    %v528 = vunpack.c.l.b16 %v492
    %v529 = vunpack.c.l.b16 %v493
    %v530 = vunpack.c.l.b16 %v494
    %v531 = vunpack.c.l.b16 %v495
    %v532 = vunpack.c.l.b16 %v496
    %v533 = vunpack.c.l.b16 %v497
    %v534 = vunpack.c.l.b16 %v498
    %v535 = vunpack.c.l.b16 %v499
    %v536 = vunpack.c.l.b16 %v500
    %v537 = vpack.c.b16 %v522, %v521
    %v538 = vpack.c.b16 %v524, %v523
    %v539 = vpack.c.b16 %v526, %v525
    %v540 = vpack.c.b16 %v528, %v527
    %v541 = vpack.c.b16 %v530, %v529
    %v542 = vpack.c.b16 %v532, %v531
    %v543 = vpack.c.b16 %v534, %v533
    %v544 = vpack.c.b16 %v536, %v535
    %553 = vmatpush.bf16.msra.mxu0 %v544
    %554 = vmatpush.bf16.msra.mxu0 %v543
    %555 = vmatpush.bf16.msra.mxu0 %v542
    %556 = vmatpush.bf16.msra.mxu0 %v541
    %557 = vmatpush.bf16.msra.mxu0 %v540
    %558 = vmatpush.bf16.msra.mxu0 %v539
    %559 = vmatpush.bf16.msra.mxu0 %v538
    %560 = vmatpush.bf16.msra.mxu0 %v537
    %561 = vmatmul.bf16.gmra.mxu0 %v469
    %v562 = vpop.f32.mrf.mxu0
    %v563 = vadd.f32 %v503, %v562
    %v564 = vpop.f32.mrf.mxu0
    %v565 = vadd.f32 %v503, %v564
    %566 = vmatmul.bf16.gmra.mxu0 %v470
    %v567 = vpop.f32.mrf.mxu0
    %v568 = vadd.f32 %v503, %v567
    %v569 = vpop.f32.mrf.mxu0
    %v570 = vadd.f32 %v503, %v569
    %571 = vmatmul.bf16.gmra.mxu0 %v471
    %v572 = vpop.f32.mrf.mxu0
    %v573 = vadd.f32 %v503, %v572
    %v574 = vpop.f32.mrf.mxu0
    %v575 = vadd.f32 %v503, %v574
    %576 = vmatmul.bf16.gmra.mxu0 %v472
    %v577 = vpop.f32.mrf.mxu0
    %v578 = vadd.f32 %v503, %v577
    %v579 = vpop.f32.mrf.mxu0
    %v580 = vadd.f32 %v503, %v579
    %581 = vmatmul.bf16.gmra.mxu0 %v473
    %v582 = vpop.f32.mrf.mxu0
    %v583 = vadd.f32 %v503, %v582
    %v584 = vpop.f32.mrf.mxu0
    %v585 = vadd.f32 %v503, %v584
    %586 = vmatmul.bf16.gmra.mxu0 %v474
    %v587 = vpop.f32.mrf.mxu0
    %v588 = vadd.f32 %v503, %v587
    %v589 = vpop.f32.mrf.mxu0
    %v590 = vadd.f32 %v503, %v589
    %591 = vmatmul.bf16.gmra.mxu0 %v475
    %v592 = vpop.f32.mrf.mxu0
    %v593 = vadd.f32 %v503, %v592
    %v594 = vpop.f32.mrf.mxu0
    %v595 = vadd.f32 %v503, %v594
    %596 = vmatmul.bf16.gmra.mxu0 %v476
    %v597 = vpop.f32.mrf.mxu0
    %v598 = vadd.f32 %v503, %v597
    %v599 = vpop.f32.mrf.mxu0
    %v600 = vadd.f32 %v503, %v599
    %601 = vmatmul.bf16.gmra.mxu0 %v477
    %v602 = vpop.f32.mrf.mxu0
    %v603 = vadd.f32 %v503, %v602
    %v604 = vpop.f32.mrf.mxu0
    %v605 = vadd.f32 %v503, %v604
    %606 = vmatmul.bf16.gmra.mxu0 %v478
    %v607 = vpop.f32.mrf.mxu0
    %v608 = vadd.f32 %v503, %v607
    %v609 = vpop.f32.mrf.mxu0
    %v610 = vadd.f32 %v503, %v609
    %611 = vmatmul.bf16.gmra.mxu0 %v479
    %v612 = vpop.f32.mrf.mxu0
    %v613 = vadd.f32 %v503, %v612
    %v614 = vpop.f32.mrf.mxu0
    %v615 = vadd.f32 %v503, %v614
    %616 = vmatmul.bf16.gmra.mxu0 %v480
    %v617 = vpop.f32.mrf.mxu0
    %v618 = vadd.f32 %v503, %v617
    %v619 = vpop.f32.mrf.mxu0
    %v620 = vadd.f32 %v503, %v619
    %621 = vmatmul.bf16.gmra.mxu0 %v481
    %v622 = vpop.f32.mrf.mxu0
    %v623 = vadd.f32 %v503, %v622
    %v624 = vpop.f32.mrf.mxu0
    %v625 = vadd.f32 %v503, %v624
    %626 = vmatmul.bf16.gmra.mxu0 %v482
    %v627 = vpop.f32.mrf.mxu0
    %v628 = vadd.f32 %v503, %v627
    %v629 = vpop.f32.mrf.mxu0
    %v630 = vadd.f32 %v503, %v629
    %631 = vmatmul.bf16.gmra.mxu0 %v483
    %v632 = vpop.f32.mrf.mxu0
    %v633 = vadd.f32 %v503, %v632
    %v634 = vpop.f32.mrf.mxu0
    %v635 = vadd.f32 %v503, %v634
    %636 = vmatmul.bf16.gmra.mxu0 %v484
    %v637 = vpop.f32.mrf.mxu0
    %v638 = vadd.f32 %v503, %v637
    %v639 = vpop.f32.mrf.mxu0
    %v640 = vadd.f32 %v503, %v639
    %641 = vdwg.mxu0
    %v642 = vmax.f32 %v563, 0.0
    %v643 = vmax.f32 %v565, 0.0
    %v644 = vmax.f32 %v568, 0.0
    %v645 = vmax.f32 %v570, 0.0
    %v646 = vmax.f32 %v573, 0.0
    %v647 = vmax.f32 %v575, 0.0
    %v648 = vmax.f32 %v578, 0.0
    %v649 = vmax.f32 %v580, 0.0
    %v650 = vmax.f32 %v583, 0.0
    %v651 = vmax.f32 %v585, 0.0
    %v652 = vmax.f32 %v588, 0.0
    %v653 = vmax.f32 %v590, 0.0
    %v654 = vmax.f32 %v593, 0.0
    %v655 = vmax.f32 %v595, 0.0
    %v656 = vmax.f32 %v598, 0.0
    %v657 = vmax.f32 %v600, 0.0
    %v658 = vmax.f32 %v603, 0.0
    %v659 = vmax.f32 %v605, 0.0
    %v660 = vmax.f32 %v608, 0.0
    %v661 = vmax.f32 %v610, 0.0
    %v662 = vmax.f32 %v613, 0.0
    %v663 = vmax.f32 %v615, 0.0
    %v664 = vmax.f32 %v618, 0.0
    %v665 = vmax.f32 %v620, 0.0
    %v666 = vmax.f32 %v623, 0.0
    %v667 = vmax.f32 %v625, 0.0
    %v668 = vmax.f32 %v628, 0.0
    %v669 = vmax.f32 %v630, 0.0
    %v670 = vmax.f32 %v633, 0.0
    %v671 = vmax.f32 %v635, 0.0
    %v672 = vmax.f32 %v638, 0.0
    %v673 = vmax.f32 %v640, 0.0
    %v674 = vpack.c.bf16 %v643, %v642
    %v675 = vpack.c.bf16 %v645, %v644
    %v676 = vpack.c.bf16 %v647, %v646
    %v677 = vpack.c.bf16 %v649, %v648
    %v678 = vpack.c.bf16 %v651, %v650
    %v679 = vpack.c.bf16 %v653, %v652
    %v680 = vpack.c.bf16 %v655, %v654
    %v681 = vpack.c.bf16 %v657, %v656
    %v682 = vpack.c.bf16 %v659, %v658
    %v683 = vpack.c.bf16 %v661, %v660
    %v684 = vpack.c.bf16 %v663, %v662
    %v685 = vpack.c.bf16 %v665, %v664
    %v686 = vpack.c.bf16 %v667, %v666
    %v687 = vpack.c.bf16 %v669, %v668
    %v688 = vpack.c.bf16 %v671, %v670
    %v689 = vpack.c.bf16 %v673, %v672
    %v690 = vld [vmem:[%s7] sm:$0xf]
    %v691 = vld [vmem:[%s7 + $0x4] sm:$0xf]
    %v692 = vld [vmem:[%s7 + $0x8] sm:$0xf]
    %v693 = vld [vmem:[%s7 + $0xc] sm:$0xf]
    %v694 = vld [vmem:[%s7 + $0x10] sm:$0xf]
    %v695 = vld [vmem:[%s7 + $0x14] sm:$0xf]
    %v696 = vld [vmem:[%s7 + $0x18] sm:$0xf]
    %v697 = vld [vmem:[%s7 + $0x1c] sm:$0xf]
    %v698 = vld [vmem:[%s7 + $0x20] sm:$0xf]
    %v699 = vld [vmem:[%s7 + $0x24] sm:$0xf]
    %v700 = vld [vmem:[%s7 + $0x28] sm:$0xf]
    %v701 = vld [vmem:[%s7 + $0x2c] sm:$0xf]
    %v702 = vld [vmem:[%s7 + $0x30] sm:$0xf]
    %v703 = vld [vmem:[%s7 + $0x34] sm:$0xf]
    %v704 = vld [vmem:[%s7 + $0x38] sm:$0xf]
    %v705 = vld [vmem:[%s7 + $0x3c] sm:$0xf]
    %v706 = vld [vmem:[%s8] sm:$0x1]
    %v708 = vperm.slane %v706, 0
    %v726 = vunpack.c.l.b16 %v690
    %v727 = vunpack.c.l.b16 %v691
    %v728 = vunpack.c.l.b16 %v692
    %v729 = vunpack.c.l.b16 %v693
    %v730 = vunpack.c.l.b16 %v694
    %v731 = vunpack.c.l.b16 %v695
    %v732 = vunpack.c.l.b16 %v696
    %v733 = vunpack.c.l.b16 %v697
    %v734 = vunpack.c.l.b16 %v698
    %v735 = vunpack.c.l.b16 %v699
    %v736 = vunpack.c.l.b16 %v700
    %v737 = vunpack.c.l.b16 %v701
    %v738 = vunpack.c.l.b16 %v702
    %v739 = vunpack.c.l.b16 %v703
    %v740 = vunpack.c.l.b16 %v704
    %v741 = vunpack.c.l.b16 %v705
    %v742 = vpack.c.b16 %v727, %v726
    %v743 = vpack.c.b16 %v729, %v728
    %v744 = vpack.c.b16 %v731, %v730
    %v745 = vpack.c.b16 %v733, %v732
    %v746 = vpack.c.b16 %v735, %v734
    %v747 = vpack.c.b16 %v737, %v736
    %v748 = vpack.c.b16 %v739, %v738
    %v749 = vpack.c.b16 %v741, %v740
    %758 = vmatpush.bf16.msra.mxu0 %v749
    %759 = vmatpush.bf16.msra.mxu0 %v748
    %760 = vmatpush.bf16.msra.mxu0 %v747
    %761 = vmatpush.bf16.msra.mxu0 %v746
    %762 = vmatpush.bf16.msra.mxu0 %v745
    %763 = vmatpush.bf16.msra.mxu0 %v744
    %764 = vmatpush.bf16.msra.mxu0 %v743
    %765 = vmatpush.bf16.msra.mxu0 %v742
    %766 = vmatmul.bf16.gmra.mxu0 %v674
    %v767 = vpop.f32.mrf.mxu0
    %v768 = vadd.f32 %v708, %v767
    %v769 = vpop.f32.mrf.mxu0
    %v770 = vadd.f32 %v708, %v769
    %771 = vmatmul.bf16.gmra.mxu0 %v675
    %v772 = vpop.f32.mrf.mxu0
    %v773 = vadd.f32 %v708, %v772
    %v774 = vpop.f32.mrf.mxu0
    %v775 = vadd.f32 %v708, %v774
    %776 = vmatmul.bf16.gmra.mxu0 %v676
    %v777 = vpop.f32.mrf.mxu0
    %v778 = vadd.f32 %v708, %v777
    %v779 = vpop.f32.mrf.mxu0
    %v780 = vadd.f32 %v708, %v779
    %781 = vmatmul.bf16.gmra.mxu0 %v677
    %v782 = vpop.f32.mrf.mxu0
    %v783 = vadd.f32 %v708, %v782
    %v784 = vpop.f32.mrf.mxu0
    %v785 = vadd.f32 %v708, %v784
    %786 = vmatmul.bf16.gmra.mxu0 %v678
    %v787 = vpop.f32.mrf.mxu0
    %v788 = vadd.f32 %v708, %v787
    %v789 = vpop.f32.mrf.mxu0
    %v790 = vadd.f32 %v708, %v789
    %791 = vmatmul.bf16.gmra.mxu0 %v679
    %v792 = vpop.f32.mrf.mxu0
    %v793 = vadd.f32 %v708, %v792
    %v794 = vpop.f32.mrf.mxu0
    %v795 = vadd.f32 %v708, %v794
    %796 = vmatmul.bf16.gmra.mxu0 %v680
    %v797 = vpop.f32.mrf.mxu0
    %v798 = vadd.f32 %v708, %v797
    %v799 = vpop.f32.mrf.mxu0
    %v800 = vadd.f32 %v708, %v799
    %801 = vmatmul.bf16.gmra.mxu0 %v681
    %v802 = vpop.f32.mrf.mxu0
    %v803 = vadd.f32 %v708, %v802
    %v804 = vpop.f32.mrf.mxu0
    %v805 = vadd.f32 %v708, %v804
    %806 = vmatmul.bf16.gmra.mxu0 %v682
    %v807 = vpop.f32.mrf.mxu0
    %v808 = vadd.f32 %v708, %v807
    %v809 = vpop.f32.mrf.mxu0
    %v810 = vadd.f32 %v708, %v809
    %811 = vmatmul.bf16.gmra.mxu0 %v683
    %v812 = vpop.f32.mrf.mxu0
    %v813 = vadd.f32 %v708, %v812
    %v814 = vpop.f32.mrf.mxu0
    %v815 = vadd.f32 %v708, %v814
    %816 = vmatmul.bf16.gmra.mxu0 %v684
    %v817 = vpop.f32.mrf.mxu0
    %v818 = vadd.f32 %v708, %v817
    %v819 = vpop.f32.mrf.mxu0
    %v820 = vadd.f32 %v708, %v819
    %821 = vmatmul.bf16.gmra.mxu0 %v685
    %v822 = vpop.f32.mrf.mxu0
    %v823 = vadd.f32 %v708, %v822
    %v824 = vpop.f32.mrf.mxu0
    %v825 = vadd.f32 %v708, %v824
    %826 = vmatmul.bf16.gmra.mxu0 %v686
    %v827 = vpop.f32.mrf.mxu0
    %v828 = vadd.f32 %v708, %v827
    %v829 = vpop.f32.mrf.mxu0
    %v830 = vadd.f32 %v708, %v829
    %831 = vmatmul.bf16.gmra.mxu0 %v687
    %v832 = vpop.f32.mrf.mxu0
    %v833 = vadd.f32 %v708, %v832
    %v834 = vpop.f32.mrf.mxu0
    %v835 = vadd.f32 %v708, %v834
    %836 = vmatmul.bf16.gmra.mxu0 %v688
    %v837 = vpop.f32.mrf.mxu0
    %v838 = vadd.f32 %v708, %v837
    %v839 = vpop.f32.mrf.mxu0
    %v840 = vadd.f32 %v708, %v839
    %841 = vmatmul.bf16.gmra.mxu0 %v689
    %v842 = vpop.f32.mrf.mxu0
    %v843 = vadd.f32 %v708, %v842
    %v844 = vpop.f32.mrf.mxu0
    %v845 = vadd.f32 %v708, %v844
    %846 = vdwg.mxu0
    %v847 = vlaneseq
    %v848 = vand.u32 %v847, 127
    %v849 = vmax.f32 %v768, -20.0
    %v850 = vmax.f32 %v770, -20.0
    %v851 = vmax.f32 %v773, -20.0
    %v852 = vmax.f32 %v775, -20.0
    %v853 = vmax.f32 %v778, -20.0
    %v854 = vmax.f32 %v780, -20.0
    %v855 = vmax.f32 %v783, -20.0
    %v856 = vmax.f32 %v785, -20.0
    %v857 = vmax.f32 %v788, -20.0
    %v858 = vmax.f32 %v790, -20.0
    %v859 = vmax.f32 %v793, -20.0
    %v860 = vmax.f32 %v795, -20.0
    %v861 = vmax.f32 %v798, -20.0
    %v862 = vmax.f32 %v800, -20.0
    %v863 = vmax.f32 %v803, -20.0
    %v864 = vmax.f32 %v805, -20.0
    %v865 = vmax.f32 %v808, -20.0
    %v866 = vmax.f32 %v810, -20.0
    %v867 = vmax.f32 %v813, -20.0
    %v868 = vmax.f32 %v815, -20.0
    %v869 = vmax.f32 %v818, -20.0
    %v870 = vmax.f32 %v820, -20.0
    %v871 = vmax.f32 %v823, -20.0
    %v872 = vmax.f32 %v825, -20.0
    %v873 = vmax.f32 %v828, -20.0
    %v874 = vmax.f32 %v830, -20.0
    %v875 = vmax.f32 %v833, -20.0
    %v876 = vmax.f32 %v835, -20.0
    %v877 = vmax.f32 %v838, -20.0
    %v878 = vmax.f32 %v840, -20.0
    %v879 = vmax.f32 %v843, -20.0
    %v880 = vmax.f32 %v845, -20.0
    %v881 = vmin.f32 %v849, 2.0
    %v882 = vmin.f32 %v850, 2.0
    %v883 = vmin.f32 %v851, 2.0
    %v884 = vmin.f32 %v852, 2.0
    %v885 = vmin.f32 %v853, 2.0
    %v886 = vmin.f32 %v854, 2.0
    %v887 = vmin.f32 %v855, 2.0
    %v888 = vmin.f32 %v856, 2.0
    %v889 = vmin.f32 %v857, 2.0
    %v890 = vmin.f32 %v858, 2.0
    %v891 = vmin.f32 %v859, 2.0
    %v892 = vmin.f32 %v860, 2.0
    %v893 = vmin.f32 %v861, 2.0
    %v894 = vmin.f32 %v862, 2.0
    %v895 = vmin.f32 %v863, 2.0
    %v896 = vmin.f32 %v864, 2.0
    %v897 = vmin.f32 %v865, 2.0
    %v898 = vmin.f32 %v866, 2.0
    %v899 = vmin.f32 %v867, 2.0
    %v900 = vmin.f32 %v868, 2.0
    %v901 = vmin.f32 %v869, 2.0
    %v902 = vmin.f32 %v870, 2.0
    %v903 = vmin.f32 %v871, 2.0
    %v904 = vmin.f32 %v872, 2.0
    %v905 = vmin.f32 %v873, 2.0
    %v906 = vmin.f32 %v874, 2.0
    %v907 = vmin.f32 %v875, 2.0
    %v908 = vmin.f32 %v876, 2.0
    %v909 = vmin.f32 %v877, 2.0
    %v910 = vmin.f32 %v878, 2.0
    %v911 = vmin.f32 %v879, 2.0
    %v912 = vmin.f32 %v880, 2.0
    %v913 = vmul.f32 %v881, 1.442695
    %v914 = vpow.pop %v913
    %v915 = vmul.f32 %v882, 1.442695
    %v916 = vpow.pop %v915
    %v917 = vmul.f32 %v883, 1.442695
    %v918 = vpow.pop %v917
    %v919 = vmul.f32 %v884, 1.442695
    %v920 = vpow.pop %v919
    %v921 = vmul.f32 %v885, 1.442695
    %v922 = vpow.pop %v921
    %v923 = vmul.f32 %v886, 1.442695
    %v924 = vpow.pop %v923
    %v925 = vmul.f32 %v887, 1.442695
    %v926 = vpow.pop %v925
    %v927 = vmul.f32 %v888, 1.442695
    %v928 = vpow.pop %v927
    %v929 = vmul.f32 %v889, 1.442695
    %v930 = vpow.pop %v929
    %v931 = vmul.f32 %v890, 1.442695
    %v932 = vpow.pop %v931
    %v933 = vmul.f32 %v891, 1.442695
    %v934 = vpow.pop %v933
    %v935 = vmul.f32 %v892, 1.442695
    %v936 = vpow.pop %v935
    %v937 = vmul.f32 %v893, 1.442695
    %v938 = vpow.pop %v937
    %v939 = vmul.f32 %v894, 1.442695
    %v940 = vpow.pop %v939
    %v941 = vmul.f32 %v895, 1.442695
    %v942 = vpow.pop %v941
    %v943 = vmul.f32 %v896, 1.442695
    %v944 = vpow.pop %v943
    %v945 = vmul.f32 %v897, 1.442695
    %v946 = vpow.pop %v945
    %v947 = vmul.f32 %v898, 1.442695
    %v948 = vpow.pop %v947
    %v949 = vmul.f32 %v899, 1.442695
    %v950 = vpow.pop %v949
    %v951 = vmul.f32 %v900, 1.442695
    %v952 = vpow.pop %v951
    %v953 = vmul.f32 %v901, 1.442695
    %v954 = vpow.pop %v953
    %v955 = vmul.f32 %v902, 1.442695
    %v956 = vpow.pop %v955
    %v957 = vmul.f32 %v903, 1.442695
    %v958 = vpow.pop %v957
    %v959 = vmul.f32 %v904, 1.442695
    %v960 = vpow.pop %v959
    %v961 = vmul.f32 %v905, 1.442695
    %v962 = vpow.pop %v961
    %v963 = vmul.f32 %v906, 1.442695
    %v964 = vpow.pop %v963
    %v965 = vmul.f32 %v907, 1.442695
    %v966 = vpow.pop %v965
    %v967 = vmul.f32 %v908, 1.442695
    %v968 = vpow.pop %v967
    %v969 = vmul.f32 %v909, 1.442695
    %v970 = vpow.pop %v969
    %v971 = vmul.f32 %v910, 1.442695
    %v972 = vpow.pop %v971
    %v973 = vmul.f32 %v911, 1.442695
    %v974 = vpow.pop %v973
    %v975 = vmul.f32 %v912, 1.442695
    %v976 = vpow.pop %v975
    %vm977 = vcmp.ge.s32.totalorder %v848, 64
    %v978 = vsel %vm977, %v914, %v768
    %v979 = vsel %vm977, %v916, %v770
    %v980 = vsel %vm977, %v918, %v773
    %v981 = vsel %vm977, %v920, %v775
    %v982 = vsel %vm977, %v922, %v778
    %v983 = vsel %vm977, %v924, %v780
    %v984 = vsel %vm977, %v926, %v783
    %v985 = vsel %vm977, %v928, %v785
    %v986 = vsel %vm977, %v930, %v788
    %v987 = vsel %vm977, %v932, %v790
    %v988 = vsel %vm977, %v934, %v793
    %v989 = vsel %vm977, %v936, %v795
    %v990 = vsel %vm977, %v938, %v798
    %v991 = vsel %vm977, %v940, %v800
    %v992 = vsel %vm977, %v942, %v803
    %v993 = vsel %vm977, %v944, %v805
    %v994 = vsel %vm977, %v946, %v808
    %v995 = vsel %vm977, %v948, %v810
    %v996 = vsel %vm977, %v950, %v813
    %v997 = vsel %vm977, %v952, %v815
    %v998 = vsel %vm977, %v954, %v818
    %v999 = vsel %vm977, %v956, %v820
    %v1000 = vsel %vm977, %v958, %v823
    %v1001 = vsel %vm977, %v960, %v825
    %v1002 = vsel %vm977, %v962, %v828
    %v1003 = vsel %vm977, %v964, %v830
    %v1004 = vsel %vm977, %v966, %v833
    %v1005 = vsel %vm977, %v968, %v835
    %v1006 = vsel %vm977, %v970, %v838
    %v1007 = vsel %vm977, %v972, %v840
    %v1008 = vsel %vm977, %v974, %v843
    %v1009 = vsel %vm977, %v976, %v845
    %1010 = vst [vmem:[#allocation2] sm:$0xff] %v978
    %1011 = vst [vmem:[#allocation2 + $0x8] sm:$0xff] %v979
    %1012 = vst [vmem:[#allocation2 + $0x10] sm:$0xff] %v980
    %1013 = vst [vmem:[#allocation2 + $0x18] sm:$0xff] %v981
    %1014 = vst [vmem:[#allocation2 + $0x20] sm:$0xff] %v982
    %1015 = vst [vmem:[#allocation2 + $0x28] sm:$0xff] %v983
    %1016 = vst [vmem:[#allocation2 + $0x30] sm:$0xff] %v984
    %1017 = vst [vmem:[#allocation2 + $0x38] sm:$0xff] %v985
    %1018 = vst [vmem:[#allocation2 + $0x40] sm:$0xff] %v986
    %1019 = vst [vmem:[#allocation2 + $0x48] sm:$0xff] %v987
    %1020 = vst [vmem:[#allocation2 + $0x50] sm:$0xff] %v988
    %1021 = vst [vmem:[#allocation2 + $0x58] sm:$0xff] %v989
    %1022 = vst [vmem:[#allocation2 + $0x60] sm:$0xff] %v990
    %1023 = vst [vmem:[#allocation2 + $0x68] sm:$0xff] %v991
    %1024 = vst [vmem:[#allocation2 + $0x70] sm:$0xff] %v992
    %1025 = vst [vmem:[#allocation2 + $0x78] sm:$0xff] %v993
    %1026 = vst [vmem:[#allocation2 + $0x80] sm:$0xff] %v994
    %1027 = vst [vmem:[#allocation2 + $0x88] sm:$0xff] %v995
    %1028 = vst [vmem:[#allocation2 + $0x90] sm:$0xff] %v996
    %1029 = vst [vmem:[#allocation2 + $0x98] sm:$0xff] %v997
    %1030 = vst [vmem:[#allocation2 + $0xa0] sm:$0xff] %v998
    %1031 = vst [vmem:[#allocation2 + $0xa8] sm:$0xff] %v999
    %1032 = vst [vmem:[#allocation2 + $0xb0] sm:$0xff] %v1000
    %1033 = vst [vmem:[#allocation2 + $0xb8] sm:$0xff] %v1001
    %1034 = vst [vmem:[#allocation2 + $0xc0] sm:$0xff] %v1002
    %1035 = vst [vmem:[#allocation2 + $0xc8] sm:$0xff] %v1003
    %1036 = vst [vmem:[#allocation2 + $0xd0] sm:$0xff] %v1004
    %1037 = vst [vmem:[#allocation2 + $0xd8] sm:$0xff] %v1005
    %1038 = vst [vmem:[#allocation2 + $0xe0] sm:$0xff] %v1006
    %1039 = vst [vmem:[#allocation2 + $0xe8] sm:$0xff] %v1007
    %1040 = vst [vmem:[#allocation2 + $0xf0] sm:$0xff] %v1008
    %1041 = vst [vmem:[#allocation2 + $0xf8] sm:$0xff] %v1009
    // Predicated region
    $region38: #{tpu_custom_call.1} parent=1 // pred_check
      _
    $region39: #{tpu_custom_call.1} parent=1 // pred_check_branch
      %1043 = sbr.rel (0) target = $region41
    $region40: #{tpu_custom_call.1} parent=1 // pred_region
      %1045 = vsyncadd [#allocation3], 0
      %s1046 = sshll.u32 [#allocation2], 4
      %s1047 = int_to_ptr.vmem [resolvable:$true] %s1046
      %s1048 = sshll.u32 %s9, 4
      %s1049 = int_to_ptr.hbm [resolvable:$true] %s1048
      %1054 = dma.vmem_to_hbm [thread:$0]  %s1047, 4096, %s1049, [#allocation3], 128, 128, 8
    $region41: #{tpu_custom_call.1} parent=1 // pred_fallthru
      _
    // Predicated region
    $region42: #{tpu_custom_call.1} parent=1 // pred_check
      _
    $region43: #{tpu_custom_call.1} parent=1 // pred_check_branch
      %1056 = sbr.rel (0) target = $region45
    $region44: #{tpu_custom_call.1} parent=1 // pred_region
      %1058 = dma.done [#allocation3], 4096
    $region45: #{tpu_custom_call.1} parent=1 // pred_fallthru
      _
    %1059 = vsyncpa [#allocation3], 1

</llo_original>
